<compile_context>
chip_gen: v6e
topology: v6e:2x2x1
jax: 0.10.0
libtpu: 0.0.40
codegen_flags: <defaults>
</compile_context>

<pallas_src>
import functools

import jax
import jax.numpy as jnp
from jax.experimental import pallas as pl
from jax.experimental.pallas import tpu as pltpu

_LANE = 128


def _round_up(x, m):
    return (x + m - 1) // m * m


def _conv_gemm_stats_kernel(p_ref, w_ref, y_ref, sum_ref, ssq_ref):
    # (tm, K) bf16 @ (K, Cout_pad) bf16 -> f32 on the MXU.
    y = jnp.dot(p_ref[...], w_ref[...], preferred_element_type=jnp.float32)
    y_ref[...] = y
    # Fused BN partial statistics while the tile is still in vregs.
    # (Zero-padded rows / channels contribute exactly 0 to both sums.)
    s = jnp.sum(y, axis=0, keepdims=True)        # (1, Cout_pad)
    sq = jnp.sum(y * y, axis=0, keepdims=True)   # (1, Cout_pad)
    sum_ref[...] = jnp.broadcast_to(s[None], sum_ref.shape)
    ssq_ref[...] = jnp.broadcast_to(sq[None], ssq_ref.shape)


def _bn_act_kernel(y_ref, scale_ref, bias_ref, o_ref):
    # Fused BatchNorm affine + LeakyReLU(0.1); scale/bias are single (1, Cout_pad) rows.
    y = y_ref[...] * scale_ref[...] + bias_ref[...]
    o_ref[...] = jnp.where(y > 0, y, 0.1 * y)


def _im2col(x_nhwc, kernel_size, stride, padding):
    n, h, w, c = x_nhwc.shape
    oh = (h + 2 * padding - kernel_size) // stride + 1
    ow = (w + 2 * padding - kernel_size) // stride + 1
    xp = jnp.pad(x_nhwc, ((0, 0), (padding, padding), (padding, padding), (0, 0)))
    cols = []
    for kh in range(kernel_size):
        for kw in range(kernel_size):
            cols.append(
                xp[:, kh:kh + (oh - 1) * stride + 1:stride,
                      kw:kw + (ow - 1) * stride + 1:stride, :])
    patches = jnp.concatenate(cols, axis=-1)  # (N, OH, OW, KH*KW*Cin), bf16
    return patches.reshape(n * oh * ow, kernel_size * kernel_size * c), oh, ow


def _select_tm(m, kdim, cout_pad, vmem_budget=40 * 1024 * 1024):
    """Largest M tile that fits the VMEM budget and keeps >= 2 grid steps when possible."""
    for cand in (2048, 1024, 512, 256, 128):
        m_pad = _round_up(m, cand)
        if cand > 128 and m_pad // cand < 2:
            continue  # keep the 'parallel' axis shardable across v7x's 2 TensorCores
        k1 = (2 * cand * kdim * 2            # bf16 patch tile, double-buffered
              + 2 * kdim * cout_pad * 2      # bf16 weight (pipeline buffers)
              + 2 * cand * cout_pad * 4      # f32 conv-out tile, double-buffered
              + 4 * 8 * cout_pad * 4)        # partial-stat tiles
        k2 = 4 * cand * cout_pad * 4 + 8 * cout_pad * 4
        if max(k1, k2) <= vmem_budget:
            return cand
    return 128


@functools.partial(jax.jit, static_argnames=("stride", "eps"))
def conv_block_forward(x_nchw, weight, gamma, beta, *, stride, eps=1e-5):
    n, cin, h, w = x_nchw.shape
    cout, cin_w, kh, kw = weight.shape
    assert cin == cin_w and kh == kw
    k = kh
    padding = (k - 1) // 2

    # NCHW -> NHWC, cast to bf16 up front so the materialized im2col buffer is half-size.
    x_nhwc = jnp.transpose(x_nchw, (0, 2, 3, 1)).astype(jnp.bfloat16)
    patches, oh, ow = _im2col(x_nhwc, k, stride, padding)
    m, kdim = patches.shape

    # Lane-dense output channels: pad Cout to a multiple of 128.
    cout_pad = _round_up(cout, _LANE)

    # PyTorch weight (Cout, Cin, KH, KW) -> (KH*KW*Cin, Cout_pad) bf16, zero-padded columns.
    w_mat = jnp.transpose(weight, (2, 3, 1, 0)).reshape(kdim, cout)
    w_mat = jnp.pad(w_mat, ((0, 0), (0, cout_pad - cout))).astype(jnp.bfloat16)

    tm = _select_tm(m, kdim, cout_pad)
    m_pad = _round_up(m, tm)
    grid_m = m_pad // tm
    patches_p = jnp.pad(patches, ((0, m_pad - m), (0, 0)))

    k1_bytes = (2 * tm * kdim * 2 + 2 * kdim * cout_pad * 2
                + 2 * tm * cout_pad * 4 + 4 * 8 * cout_pad * 4)
    k2_bytes = 4 * tm * cout_pad * 4 + 8 * cout_pad * 4
    vmem_limit = int(min(64 * 1024 * 1024,
                         max(32 * 1024 * 1024, max(k1_bytes, k2_bytes) + (4 << 20))))
    cparams = pltpu.CompilerParams(dimension_semantics=("parallel",),
                                   vmem_limit_bytes=vmem_limit)

    # --- Kernel 1: convolution as lane-dense tiled GEMM + fused BN partial statistics ---
    y_p, psum, pssq = pl.pallas_call(
        _conv_gemm_stats_kernel,
        out_shape=(jax.ShapeDtypeStruct((m_pad, cout_pad), jnp.float32),
                   jax.ShapeDtypeStruct((grid_m, 8, cout_pad), jnp.float32),
                   jax.ShapeDtypeStruct((grid_m, 8, cout_pad), jnp.float32)),
        grid=(grid_m,),
        in_specs=[pl.BlockSpec((tm, kdim), lambda i: (i, 0)),
                  pl.BlockSpec((kdim, cout_pad), lambda i: (0, 0))],
        out_specs=[pl.BlockSpec((tm, cout_pad), lambda i: (i, 0)),
                   pl.BlockSpec((1, 8, cout_pad), lambda i: (i, 0, 0)),
                   pl.BlockSpec((1, 8, cout_pad), lambda i: (i, 0, 0))],
        compiler_params=cparams,
    )(patches_p, w_mat)

    # Tiny (grid_m, Cout) finalize of the batch statistics.  Biased variance over the
    # real m rows == PyTorch BatchNorm2d training-mode normalization.
    tot_sum = jnp.sum(psum[:, 0, :cout], axis=0)
    tot_ssq = jnp.sum(pssq[:, 0, :cout], axis=0)
    mean = tot_sum / m
    var = jnp.maximum(tot_ssq / m - mean * mean, 0.0)
    scale = gamma / jnp.sqrt(var + eps)
    bias = beta - mean * scale
    scale_p = jnp.pad(scale.reshape(1, cout), ((0, 0), (0, cout_pad - cout)))
    bias_p = jnp.pad(bias.reshape(1, cout), ((0, 0), (0, cout_pad - cout)))

    # --- Kernel 2: fused BN affine + LeakyReLU(0.1), in place over the conv output ---
    o_p = pl.pallas_call(
        _bn_act_kernel,
        out_shape=jax.ShapeDtypeStruct((m_pad, cout_pad), jnp.float32),
        grid=(grid_m,),
        in_specs=[pl.BlockSpec((tm, cout_pad), lambda i: (i, 0)),
                  pl.BlockSpec((1, cout_pad), lambda i: (0, 0)),
                  pl.BlockSpec((1, cout_pad), lambda i: (0, 0))],
        out_specs=pl.BlockSpec((tm, cout_pad), lambda i: (i, 0)),
        compiler_params=cparams,
        input_output_aliases={0: 0},
    )(y_p, scale_p, bias_p)

    out = o_p[:m, :cout].reshape(n, oh, ow, cout)
    return jnp.transpose(out, (0, 3, 1, 2)).astype(x_nchw.dtype)  # back to NCHW


if __name__ == "__main__":
    key = jax.random.PRNGKey(0)
    k1, k2, k3, k4 = jax.random.split(key, 4)

    N, Cin, H, W = 2, 4, 16, 16
    Cout, K, S = 8, 3, 1

    x = jax.random.normal(k1, (N, Cin, H, W), jnp.float32)
    weight = 0.1 * jax.random.normal(k2, (Cout, Cin, K, K), jnp.float32)  # conv weight (no bias)
    gamma = 1.0 + 0.1 * jax.random.normal(k3, (Cout,), jnp.float32)       # BN weight
    beta = 0.1 * jax.random.normal(k4, (Cout,), jnp.float32)              # BN bias

    out = conv_block_forward(x, weight, gamma, beta, stride=S)
    out = jax.block_until_ready(out)
    assert out.shape == (N, Cout, H // S, W // S)
    assert bool(jnp.all(jnp.isfinite(out)))
    print("KERNEL_OK")
</pallas_src>

<mosaic_0001>
module attributes {stable_mosaic.version = 11 : i64} {
  func.func @_conv_gemm_stats_kernel(%arg0: i32, %arg1: memref<256x36xbf16, #tpu.memory_space<vmem>>, %arg2: memref<36x128xbf16, #tpu.memory_space<vmem>>, %arg3: memref<256x128xf32, #tpu.memory_space<vmem>>, %arg4: memref<1x8x128xf32, #tpu.memory_space<vmem>>, %arg5: memref<1x8x128xf32, #tpu.memory_space<vmem>>) attributes {dimension_semantics = [#tpu.dimension_semantics<parallel>], iteration_bounds = array<i64: 2>, scalar_prefetch = 0 : i64, scratch_operands = 0 : i64, tpu.core_type = #tpu.core_type<tc>, window_params = [{transform_indices = @transform_0, window_bounds = array<i64: 256, 36>}, {pipeline_mode = #tpu.pipeline_mode<synchronous>, transform_indices = @transform_1, window_bounds = array<i64: 36, 128>}, {transform_indices = @transform_2, window_bounds = array<i64: 256, 128>}, {transform_indices = @transform_3, window_bounds = array<i64: 1, 8, 128>}, {transform_indices = @transform_4, window_bounds = array<i64: 1, 8, 128>}]} {
    %c0 = arith.constant 0 : index
    %c0_0 = arith.constant 0 : index
    %0 = vector.load %arg1[%c0, %c0_0] : memref<256x36xbf16, #tpu.memory_space<vmem>>, vector<256x36xbf16>
    %c0_1 = arith.constant 0 : index
    %c0_2 = arith.constant 0 : index
    %1 = vector.load %arg2[%c0_1, %c0_2] : memref<36x128xbf16, #tpu.memory_space<vmem>>, vector<36x128xbf16>
    %cst = arith.constant dense<0.000000e+00> : vector<256x128xf32>
    %2 = tpu.matmul %0, %1, %cst {dimension_numbers = #tpu.dot_dimension_numbers<[1], [0], [0], [1], [0, 0, 1, 1], [], []>} : vector<256x36xbf16>, vector<36x128xbf16>, vector<256x128xf32> -> vector<256x128xf32>
    %c0_3 = arith.constant 0 : index
    %c0_4 = arith.constant 0 : index
    %3 = vector.load %arg3[%c0_3, %c0_4] : memref<256x128xf32, #tpu.memory_space<vmem>>, vector<256x128xf32>
    tpu.vector_store %arg3[%c0_3, %c0_4], %2 {strides = array<i32>} : memref<256x128xf32, #tpu.memory_space<vmem>>, vector<256x128xf32>,
    %cst_5 = arith.constant dense<0.000000e+00> : vector<128xf32>
    %4 = vector.multi_reduction <add>, %2, %cst_5 [0] : vector<256x128xf32> to vector<128xf32>
    %5 = vector.shape_cast %4 : vector<128xf32> to vector<1x128xf32>
    %6 = arith.mulf %2, %2 : vector<256x128xf32>
    %cst_6 = arith.constant dense<0.000000e+00> : vector<128xf32>
    %7 = vector.multi_reduction <add>, %6, %cst_6 [0] : vector<256x128xf32> to vector<128xf32>
    %8 = vector.shape_cast %7 : vector<128xf32> to vector<1x128xf32>
    %9 = vector.shape_cast %5 : vector<1x128xf32> to vector<1x1x128xf32>
    %10 = vector.shape_cast %9 : vector<1x1x128xf32> to vector<1x1x128xf32>
    %11 = vector.broadcast %10 : vector<1x1x128xf32> to vector<1x8x128xf32>
    %c0_7 = arith.constant 0 : index
    %c0_8 = arith.constant 0 : index
    %c0_9 = arith.constant 0 : index
    %12 = vector.load %arg4[%c0_7, %c0_8, %c0_9] : memref<1x8x128xf32, #tpu.memory_space<vmem>>, vector<1x8x128xf32>
    tpu.vector_store %arg4[%c0_7, %c0_8, %c0_9], %11 {strides = array<i32>} : memref<1x8x128xf32, #tpu.memory_space<vmem>>, vector<1x8x128xf32>,
    %13 = vector.shape_cast %8 : vector<1x128xf32> to vector<1x1x128xf32>
    %14 = vector.shape_cast %13 : vector<1x1x128xf32> to vector<1x1x128xf32>
    %15 = vector.broadcast %14 : vector<1x1x128xf32> to vector<1x8x128xf32>
    %c0_10 = arith.constant 0 : index
    %c0_11 = arith.constant 0 : index
    %c0_12 = arith.constant 0 : index
    %16 = vector.load %arg5[%c0_10, %c0_11, %c0_12] : memref<1x8x128xf32, #tpu.memory_space<vmem>>, vector<1x8x128xf32>
    tpu.vector_store %arg5[%c0_10, %c0_11, %c0_12], %15 {strides = array<i32>} : memref<1x8x128xf32, #tpu.memory_space<vmem>>, vector<1x8x128xf32>,
    return
  }
  func.func @transform_0(%arg0: i32) -> (i32, i32) {
    %c0_i32 = arith.constant 0 : i32
    %c0_i32_0 = arith.constant 0 : i32
    return %arg0, %c0_i32 : i32, i32
  }
  func.func @transform_1(%arg0: i32) -> (i32, i32) {
    %c0_i32 = arith.constant 0 : i32
    %c0_i32_0 = arith.constant 0 : i32
    %c0_i32_1 = arith.constant 0 : i32
    return %c0_i32, %c0_i32_0 : i32, i32
  }
  func.func @transform_2(%arg0: i32) -> (i32, i32) {
    %c0_i32 = arith.constant 0 : i32
    %c0_i32_0 = arith.constant 0 : i32
    return %arg0, %c0_i32 : i32, i32
  }
  func.func @transform_3(%arg0: i32) -> (i32, i32, i32) {
    %c0_i32 = arith.constant 0 : i32
    %c0_i32_0 = arith.constant 0 : i32
    %c0_i32_1 = arith.constant 0 : i32
    return %arg0, %c0_i32, %c0_i32_0 : i32, i32, i32
  }
  func.func @transform_4(%arg0: i32) -> (i32, i32, i32) {
    %c0_i32 = arith.constant 0 : i32
    %c0_i32_0 = arith.constant 0 : i32
    %c0_i32_1 = arith.constant 0 : i32
    return %arg0, %c0_i32, %c0_i32_0 : i32, i32, i32
  }
}

module attributes {stable_mosaic.version = 11 : i64} {
  func.func @_bn_act_kernel(%arg0: i32, %arg1: memref<256x128xf32, #tpu.memory_space<vmem>>, %arg2: memref<1x128xf32, #tpu.memory_space<vmem>>, %arg3: memref<1x128xf32, #tpu.memory_space<vmem>>, %arg4: memref<256x128xf32, #tpu.memory_space<vmem>>) attributes {dimension_semantics = [#tpu.dimension_semantics<parallel>], iteration_bounds = array<i64: 2>, scalar_prefetch = 0 : i64, scratch_operands = 0 : i64, tpu.core_type = #tpu.core_type<tc>, window_params = [{transform_indices = @transform_0, window_bounds = array<i64: 256, 128>}, {pipeline_mode = #tpu.pipeline_mode<synchronous>, transform_indices = @transform_1, window_bounds = array<i64: 1, 128>}, {pipeline_mode = #tpu.pipeline_mode<synchronous>, transform_indices = @transform_2, window_bounds = array<i64: 1, 128>}, {transform_indices = @transform_3, window_bounds = array<i64: 256, 128>}]} {
    %c0 = arith.constant 0 : index
    %c0_0 = arith.constant 0 : index
    %0 = vector.load %arg1[%c0, %c0_0] : memref<256x128xf32, #tpu.memory_space<vmem>>, vector<256x128xf32>
    %c0_1 = arith.constant 0 : index
    %c0_2 = arith.constant 0 : index
    %1 = vector.load %arg2[%c0_1, %c0_2] : memref<1x128xf32, #tpu.memory_space<vmem>>, vector<1x128xf32>
    %2 = vector.broadcast %1 : vector<1x128xf32> to vector<256x128xf32>
    %3 = arith.mulf %0, %2 : vector<256x128xf32>
    %c0_3 = arith.constant 0 : index
    %c0_4 = arith.constant 0 : index
    %4 = vector.load %arg3[%c0_3, %c0_4] : memref<1x128xf32, #tpu.memory_space<vmem>>, vector<1x128xf32>
    %5 = vector.broadcast %4 : vector<1x128xf32> to vector<256x128xf32>
    %6 = arith.addf %3, %5 : vector<256x128xf32>
    %cst = arith.constant 0.000000e+00 : f32
    %7 = vector.broadcast %cst : f32 to vector<256x128xf32>
    %8 = arith.cmpf ogt, %6, %7 : vector<256x128xf32>
    %cst_5 = arith.constant 1.000000e-01 : f32
    %9 = vector.broadcast %cst_5 : f32 to vector<256x128xf32>
    %10 = arith.mulf %9, %6 : vector<256x128xf32>
    %11 = arith.select %8, %6, %10 : vector<256x128xi1>, vector<256x128xf32>
    %c0_6 = arith.constant 0 : index
    %c0_7 = arith.constant 0 : index
    %12 = vector.load %arg4[%c0_6, %c0_7] : memref<256x128xf32, #tpu.memory_space<vmem>>, vector<256x128xf32>
    tpu.vector_store %arg4[%c0_6, %c0_7], %11 {strides = array<i32>} : memref<256x128xf32, #tpu.memory_space<vmem>>, vector<256x128xf32>,
    return
  }
  func.func @transform_0(%arg0: i32) -> (i32, i32) {
    %c0_i32 = arith.constant 0 : i32
    %c0_i32_0 = arith.constant 0 : i32
    return %arg0, %c0_i32 : i32, i32
  }
  func.func @transform_1(%arg0: i32) -> (i32, i32) {
    %c0_i32 = arith.constant 0 : i32
    %c0_i32_0 = arith.constant 0 : i32
    %c0_i32_1 = arith.constant 0 : i32
    return %c0_i32, %c0_i32_0 : i32, i32
  }
  func.func @transform_2(%arg0: i32) -> (i32, i32) {
    %c0_i32 = arith.constant 0 : i32
    %c0_i32_0 = arith.constant 0 : i32
    %c0_i32_1 = arith.constant 0 : i32
    return %c0_i32, %c0_i32_0 : i32, i32
  }
  func.func @transform_3(%arg0: i32) -> (i32, i32) {
    %c0_i32 = arith.constant 0 : i32
    %c0_i32_0 = arith.constant 0 : i32
    return %arg0, %c0_i32 : i32, i32
  }
}

</mosaic_0001>

<llo_original>
// kernel: conv_block_forward.3
$region0: #{conv_block_forward.3}
  #allocation0 [shape = 'u32[]', space=smem, size = 0x4, offset = 0x4, fixed_abs, tag = 'smem constant byte address 0x4 - core index']
  #allocation1 [shape = 'u32[144,128]{1,0:T(1,128)}', space=vmem, size = 0x12000, scoped, tag = 'internal scratch']
  %s0 = inlined_call_operand.vmem [shape: f32[512,128], index: 0, kind: input, shape index: {}, may-alias: {0,3}]
  %s1 = inlined_call_operand.vmem [shape: f32[1,128], index: 1, kind: input, shape index: {}]
  %s2 = inlined_call_operand.vmem [shape: f32[1,128], index: 2, kind: input, shape index: {}]
  %s3 = inlined_call_operand.vmem [shape: f32[512,128], index: 3, kind: output, shape index: {}, may-alias: {0,3}]
  %s4 = sld [smem:[#allocation0]]
  $region45: #{conv_block_forward.3} parent=0
    _
  %s6 = ssub.s32 1, %s4
  %s7 = scalar_select 0, %s6, %s4
  loop: start=0, step=1, limit=4
  $region2: #{conv_block_forward.3} parent=0 // loop_pre_header
    _
  $region3: #{conv_block_forward.3} parent=0 // loop_header
    %s9 = sphi 0, %s13
    %p10 = scmp.ge.s32.totalorder %s9, 4
    %s19 = sphi 0, %s21
    %s22 = sphi 0, %s19
    %s23 = sphi 0, %s22
    %s39 = sphi 0, %s23
    %s43 = sphi 0, %s43
    %s45 = sphi 0, %s43
    %s46 = sphi 0, %s45
    %s60 = sphi 0, %s46
    %s64 = sphi 0, %s64
    %s66 = sphi 0, %s64
    %s67 = sphi 0, %s66
    %s81 = sphi 0, %s67
    %s87 = sphi 0, %s89
    %s90 = sphi 0, %s87
    %s91 = sphi 0, %s90
    %s107 = sphi 0, %s91
  $region4: #{conv_block_forward.3} parent=0 // loop_header_branch
    %12 = sbr.rel (%p10) target = $region8
  $region5: #{conv_block_forward.3} parent=0 // loop_body
    %s14 = ssub.s32 %s9, 1
    %s15 = ssub.s32 %s9, 2
    %s16 = sadd.s32 %s9, 1
    %s17 = ssub.s32 %s9, %s16
    %p18 = scmp.eq.s32.totalorder %s17, 0
    %s20 = sadd.s32 %s19, 1
    %s21 = scalar_select %p18, %s19, %s20
    %p24 = pneg %p18
    %p25 = scmp.eq.s32.totalorder %s9, 1
    %p26 = por %p24, %p25
    %p27 = scmp.ne.s32.totalorder %s19, %s22
    %p28 = scmp.eq.s32.totalorder %s9, 0
    %p29 = por %p27, %p28
    %p30 = scmp.ne.s32.totalorder %s19, %s22
    %p31 = scmp.eq.s32.totalorder %s14, 1
    %p32 = por %p30, %p31
    %p33 = scmp.ne.s32.totalorder %s22, %s23
    %p34 = scmp.eq.s32.totalorder %s14, 0
    %p35 = por %p33, %p34
    %p36 = scmp.ne.s32.totalorder %s22, %s23
    %p37 = scmp.eq.s32.totalorder %s15, 1
    %p38 = por %p36, %p37
    %p40 = scmp.ne.s32.totalorder %s23, %s39
    %p41 = scmp.eq.s32.totalorder %s15, 0
    %p42 = por %p40, %p41
    %s44 = sadd.s32 %s43, 1
    %p47 = scmp.eq.s32.totalorder %s9, 1
    %p48 = scmp.ne.s32.totalorder %s43, %s45
    %p49 = scmp.eq.s32.totalorder %s9, 0
    %p50 = por %p48, %p49
    %p51 = scmp.ne.s32.totalorder %s43, %s45
    %p52 = scmp.eq.s32.totalorder %s14, 1
    %p53 = por %p51, %p52
    %p54 = scmp.ne.s32.totalorder %s45, %s46
    %p55 = scmp.eq.s32.totalorder %s14, 0
    %p56 = por %p54, %p55
    %p57 = scmp.ne.s32.totalorder %s45, %s46
    %p58 = scmp.eq.s32.totalorder %s15, 1
    %p59 = por %p57, %p58
    %p61 = scmp.ne.s32.totalorder %s46, %s60
    %p62 = scmp.eq.s32.totalorder %s15, 0
    %p63 = por %p61, %p62
    %s65 = sadd.s32 %s64, 1
    %p68 = scmp.eq.s32.totalorder %s9, 1
    %p69 = scmp.ne.s32.totalorder %s64, %s66
    %p70 = scmp.eq.s32.totalorder %s9, 0
    %p71 = por %p69, %p70
    %p72 = scmp.ne.s32.totalorder %s64, %s66
    %p73 = scmp.eq.s32.totalorder %s14, 1
    %p74 = por %p72, %p73
    %p75 = scmp.ne.s32.totalorder %s66, %s67
    %p76 = scmp.eq.s32.totalorder %s14, 0
    %p77 = por %p75, %p76
    %p78 = scmp.ne.s32.totalorder %s66, %s67
    %p79 = scmp.eq.s32.totalorder %s15, 1
    %p80 = por %p78, %p79
    %p82 = scmp.ne.s32.totalorder %s67, %s81
    %p83 = scmp.eq.s32.totalorder %s15, 0
    %p84 = por %p82, %p83
    %s85 = ssub.s32 %s9, %s16
    %p86 = scmp.eq.s32.totalorder %s85, 0
    %s88 = sadd.s32 %s87, 1
    %s89 = scalar_select %p86, %s87, %s88
    %p92 = pneg %p86
    %p93 = scmp.eq.s32.totalorder %s9, 1
    %p94 = por %p92, %p93
    %p95 = scmp.ne.s32.totalorder %s87, %s90
    %p96 = scmp.eq.s32.totalorder %s9, 0
    %p97 = por %p95, %p96
    %p98 = scmp.ne.s32.totalorder %s87, %s90
    %p99 = scmp.eq.s32.totalorder %s14, 1
    %p100 = por %p98, %p99
    %p101 = scmp.ne.s32.totalorder %s90, %s91
    %p102 = scmp.eq.s32.totalorder %s14, 0
    %p103 = por %p101, %p102
    %p104 = scmp.ne.s32.totalorder %s90, %s91
    %p105 = scmp.eq.s32.totalorder %s15, 1
    %p106 = por %p104, %p105
    %p108 = scmp.ne.s32.totalorder %s91, %s107
    %p109 = scmp.eq.s32.totalorder %s15, 0
    %p110 = por %p108, %p109
    %p111 = scmp.le.s32.totalorder 1, %s9
    %p112 = scmp.lt.s32.totalorder %s9, 3
    %p113 = pnand %p111, %p112
    %p114 = pneg %p113
    // Predicated region
    $region9: #{conv_block_forward.3} parent=5 // pred_check
      _
    $region10: #{conv_block_forward.3} parent=5 // pred_check_branch
      %116 = sbr.rel (%p113) target = $region12
    $region11: #{conv_block_forward.3} parent=5 // pred_region
      %s117 = ssub.s32 %s9, 1
      // Predicated region
      $region13: #{conv_block_forward.3} parent=11 // pred_check
        %p118 = pneg %p56
      $region14: #{conv_block_forward.3} parent=11 // pred_check_branch
        %120 = sbr.rel (%p118) target = $region16
      $region15: #{conv_block_forward.3} parent=11 // pred_region
        _
      $region16: #{conv_block_forward.3} parent=11 // pred_fallthru
        _
      // Predicated region
      $region17: #{conv_block_forward.3} parent=11 // pred_check
        %p121 = pneg %p77
      $region18: #{conv_block_forward.3} parent=11 // pred_check_branch
        %123 = sbr.rel (%p121) target = $region20
      $region19: #{conv_block_forward.3} parent=11 // pred_region
        _
      $region20: #{conv_block_forward.3} parent=11 // pred_fallthru
        _
    $region12: #{conv_block_forward.3} parent=5 // pred_fallthru
      _
    %p124 = scmp.lt.s32.totalorder %s9, 2
    // Predicated region
    $region21: #{conv_block_forward.3} parent=5 // pred_check
      %p125 = pneg %p124
    $region22: #{conv_block_forward.3} parent=5 // pred_check_branch
      %127 = sbr.rel (%p125) target = $region24
    $region23: #{conv_block_forward.3} parent=5 // pred_region
      // Predicated region
      $region25: #{conv_block_forward.3} parent=23 // pred_check
        %p128 = pneg %p29
      $region26: #{conv_block_forward.3} parent=23 // pred_check_branch
        %130 = sbr.rel (%p128) target = $region28
      $region27: #{conv_block_forward.3} parent=23 // pred_region
        %s131 = smul.u32 32, %s9
        %p132 = scmp.lt.s32.totalorder %s131, 63
        %s133 = scalar_select %p132, %s131, 63
        %s134 = smul.addr %s133, 8
        %s135 = scalar_lea.vmem %s0, %s134
        %s136 = smul.u32 32, %s9
      $region28: #{conv_block_forward.3} parent=23 // pred_fallthru
        _
    $region24: #{conv_block_forward.3} parent=5 // pred_fallthru
      _
    %p137 = scmp.le.s32.totalorder 1, %s9
    %p138 = scmp.lt.s32.totalorder %s9, 3
    %p139 = pnand %p137, %p138
    %p140 = pneg %p139
    // Predicated region
    $region29: #{conv_block_forward.3} parent=5 // pred_check
      _
    $region30: #{conv_block_forward.3} parent=5 // pred_check_branch
      %142 = sbr.rel (%p139) target = $region32
    $region31: #{conv_block_forward.3} parent=5 // pred_region
      %s143 = ssub.s32 %s9, 1
      %s144 = smul.u32 32, %s14
      %p145 = scmp.lt.s32.totalorder %s144, 63
      %s146 = scalar_select %p145, %s144, 63
      %s147 = smul.addr %s146, 8
      %s148 = scalar_lea.vmem %s0, %s147
      %p149 = pneg %p35
      %p150 = pneg %p32
      %p151 = pneg %p56
      %p152 = pneg %p53
      %p153 = pneg %p77
      %p154 = pneg %p74
      %p155 = pneg %p103
      %p156 = pneg %p100
      %s157 = smul.u32 32, %s14
      %p158 = scmp.lt.s32.totalorder %s157, 63
      %s159 = scalar_select %p158, %s157, 63
      %s160 = smul.addr %s159, 8
      %s161 = scalar_lea.vmem %s3, %s160
      %s162 = smul.u32 32, %s14
      %p163 = scmp.lt.s32.totalorder %s162, 63
      %s164 = scalar_select %p163, %s162, 63
      %s165 = smul.addr %s164, 8
      %s166 = scalar_lea.vmem %s0, %s165
      %s167 = smul.u32 32, %s14
      %s168 = smul.u32 32, %s14
      %p169 = scmp.lt.s32.totalorder %s168, 63
      %s170 = scalar_select %p169, %s168, 63
      %s171 = smul.addr %s170, 8
      %s172 = scalar_lea.vmem %s3, %s171
      %s173 = smul.u32 32, %s14
      %v174 = vld [vmem:[%s166] sm:$0xff]
      %v175 = vld [vmem:[%s166 + $0x8] sm:$0xff]
      %v176 = vld [vmem:[%s166 + $0x10] sm:$0xff]
      %v177 = vld [vmem:[%s166 + $0x18] sm:$0xff]
      %v178 = vld [vmem:[%s166 + $0x20] sm:$0xff]
      %v179 = vld [vmem:[%s166 + $0x28] sm:$0xff]
      %v180 = vld [vmem:[%s166 + $0x30] sm:$0xff]
      %v181 = vld [vmem:[%s166 + $0x38] sm:$0xff]
      %v182 = vld [vmem:[%s166 + $0x40] sm:$0xff]
      %v183 = vld [vmem:[%s166 + $0x48] sm:$0xff]
      %v184 = vld [vmem:[%s166 + $0x50] sm:$0xff]
      %v185 = vld [vmem:[%s166 + $0x58] sm:$0xff]
      %v186 = vld [vmem:[%s166 + $0x60] sm:$0xff]
      %v187 = vld [vmem:[%s166 + $0x68] sm:$0xff]
      %v188 = vld [vmem:[%s166 + $0x70] sm:$0xff]
      %v189 = vld [vmem:[%s166 + $0x78] sm:$0xff]
      %v190 = vld [vmem:[%s166 + $0x80] sm:$0xff]
      %v191 = vld [vmem:[%s166 + $0x88] sm:$0xff]
      %v192 = vld [vmem:[%s166 + $0x90] sm:$0xff]
      %v193 = vld [vmem:[%s166 + $0x98] sm:$0xff]
      %v194 = vld [vmem:[%s166 + $0xa0] sm:$0xff]
      %v195 = vld [vmem:[%s166 + $0xa8] sm:$0xff]
      %v196 = vld [vmem:[%s166 + $0xb0] sm:$0xff]
      %v197 = vld [vmem:[%s166 + $0xb8] sm:$0xff]
      %v198 = vld [vmem:[%s166 + $0xc0] sm:$0xff]
      %v199 = vld [vmem:[%s166 + $0xc8] sm:$0xff]
      %v200 = vld [vmem:[%s166 + $0xd0] sm:$0xff]
      %v201 = vld [vmem:[%s166 + $0xd8] sm:$0xff]
      %v202 = vld [vmem:[%s166 + $0xe0] sm:$0xff]
      %v203 = vld [vmem:[%s166 + $0xe8] sm:$0xff]
      %v204 = vld [vmem:[%s166 + $0xf0] sm:$0xff]
      %v205 = vld [vmem:[%s166 + $0xf8] sm:$0xff]
      %v206 = vld [vmem:[%s1] sm:$0x1]
      %v208 = vlaneseq
      %v209 = vshrl.u32 %v208, 7
      %v210 = vsub.s32 0, %v209
      %v211 = vrot.slane %v206, %v210
      %v213 = vmul.f32 %v174, %v211
      %v214 = vmul.f32 %v175, %v211
      %v215 = vmul.f32 %v176, %v211
      %v216 = vmul.f32 %v177, %v211
      %v217 = vmul.f32 %v178, %v211
      %v218 = vmul.f32 %v179, %v211
      %v219 = vmul.f32 %v180, %v211
      %v220 = vmul.f32 %v181, %v211
      %v221 = vmul.f32 %v182, %v211
      %v222 = vmul.f32 %v183, %v211
      %v223 = vmul.f32 %v184, %v211
      %v224 = vmul.f32 %v185, %v211
      %v225 = vmul.f32 %v186, %v211
      %v226 = vmul.f32 %v187, %v211
      %v227 = vmul.f32 %v188, %v211
      %v228 = vmul.f32 %v189, %v211
      %v229 = vmul.f32 %v190, %v211
      %v230 = vmul.f32 %v191, %v211
      %v231 = vmul.f32 %v192, %v211
      %v232 = vmul.f32 %v193, %v211
      %v233 = vmul.f32 %v194, %v211
      %v234 = vmul.f32 %v195, %v211
      %v235 = vmul.f32 %v196, %v211
      %v236 = vmul.f32 %v197, %v211
      %v237 = vmul.f32 %v198, %v211
      %v238 = vmul.f32 %v199, %v211
      %v239 = vmul.f32 %v200, %v211
      %v240 = vmul.f32 %v201, %v211
      %v241 = vmul.f32 %v202, %v211
      %v242 = vmul.f32 %v203, %v211
      %v243 = vmul.f32 %v204, %v211
      %v244 = vmul.f32 %v205, %v211
      %v245 = vld [vmem:[%s2] sm:$0x1]
      %v247 = vlaneseq
      %v248 = vshrl.u32 %v247, 7
      %v249 = vsub.s32 0, %v248
      %v250 = vrot.slane %v245, %v249
      %v252 = vadd.f32 %v213, %v250
      %v253 = vadd.f32 %v214, %v250
      %v254 = vadd.f32 %v215, %v250
      %v255 = vadd.f32 %v216, %v250
      %v256 = vadd.f32 %v217, %v250
      %v257 = vadd.f32 %v218, %v250
      %v258 = vadd.f32 %v219, %v250
      %v259 = vadd.f32 %v220, %v250
      %v260 = vadd.f32 %v221, %v250
      %v261 = vadd.f32 %v222, %v250
      %v262 = vadd.f32 %v223, %v250
      %v263 = vadd.f32 %v224, %v250
      %v264 = vadd.f32 %v225, %v250
      %v265 = vadd.f32 %v226, %v250
      %v266 = vadd.f32 %v227, %v250
      %v267 = vadd.f32 %v228, %v250
      %v268 = vadd.f32 %v229, %v250
      %v269 = vadd.f32 %v230, %v250
      %v270 = vadd.f32 %v231, %v250
      %v271 = vadd.f32 %v232, %v250
      %v272 = vadd.f32 %v233, %v250
      %v273 = vadd.f32 %v234, %v250
      %v274 = vadd.f32 %v235, %v250
      %v275 = vadd.f32 %v236, %v250
      %v276 = vadd.f32 %v237, %v250
      %v277 = vadd.f32 %v238, %v250
      %v278 = vadd.f32 %v239, %v250
      %v279 = vadd.f32 %v240, %v250
      %v280 = vadd.f32 %v241, %v250
      %v281 = vadd.f32 %v242, %v250
      %v282 = vadd.f32 %v243, %v250
      %v283 = vadd.f32 %v244, %v250
      %vm284 = vcmp.gt.f32.partialorder %v252, 0.0
      %vm285 = vcmp.gt.f32.partialorder %v253, 0.0
      %vm286 = vcmp.gt.f32.partialorder %v254, 0.0
      %vm287 = vcmp.gt.f32.partialorder %v255, 0.0
      %vm288 = vcmp.gt.f32.partialorder %v256, 0.0
      %vm289 = vcmp.gt.f32.partialorder %v257, 0.0
      %vm290 = vcmp.gt.f32.partialorder %v258, 0.0
      %vm291 = vcmp.gt.f32.partialorder %v259, 0.0
      %vm292 = vcmp.gt.f32.partialorder %v260, 0.0
      %vm293 = vcmp.gt.f32.partialorder %v261, 0.0
      %vm294 = vcmp.gt.f32.partialorder %v262, 0.0
      %vm295 = vcmp.gt.f32.partialorder %v263, 0.0
      %vm296 = vcmp.gt.f32.partialorder %v264, 0.0
      %vm297 = vcmp.gt.f32.partialorder %v265, 0.0
      %vm298 = vcmp.gt.f32.partialorder %v266, 0.0
      %vm299 = vcmp.gt.f32.partialorder %v267, 0.0
      %vm300 = vcmp.gt.f32.partialorder %v268, 0.0
      %vm301 = vcmp.gt.f32.partialorder %v269, 0.0
      %vm302 = vcmp.gt.f32.partialorder %v270, 0.0
      %vm303 = vcmp.gt.f32.partialorder %v271, 0.0
      %vm304 = vcmp.gt.f32.partialorder %v272, 0.0
      %vm305 = vcmp.gt.f32.partialorder %v273, 0.0
      %vm306 = vcmp.gt.f32.partialorder %v274, 0.0
      %vm307 = vcmp.gt.f32.partialorder %v275, 0.0
      %vm308 = vcmp.gt.f32.partialorder %v276, 0.0
      %vm309 = vcmp.gt.f32.partialorder %v277, 0.0
      %vm310 = vcmp.gt.f32.partialorder %v278, 0.0
      %vm311 = vcmp.gt.f32.partialorder %v279, 0.0
      %vm312 = vcmp.gt.f32.partialorder %v280, 0.0
      %vm313 = vcmp.gt.f32.partialorder %v281, 0.0
      %vm314 = vcmp.gt.f32.partialorder %v282, 0.0
      %vm315 = vcmp.gt.f32.partialorder %v283, 0.0
      %v316 = vmul.f32 %v252, 0.1
      %v317 = vmul.f32 %v253, 0.1
      %v318 = vmul.f32 %v254, 0.1
      %v319 = vmul.f32 %v255, 0.1
      %v320 = vmul.f32 %v256, 0.1
      %v321 = vmul.f32 %v257, 0.1
      %v322 = vmul.f32 %v258, 0.1
      %v323 = vmul.f32 %v259, 0.1
      %v324 = vmul.f32 %v260, 0.1
      %v325 = vmul.f32 %v261, 0.1
      %v326 = vmul.f32 %v262, 0.1
      %v327 = vmul.f32 %v263, 0.1
      %v328 = vmul.f32 %v264, 0.1
      %v329 = vmul.f32 %v265, 0.1
      %v330 = vmul.f32 %v266, 0.1
      %v331 = vmul.f32 %v267, 0.1
      %v332 = vmul.f32 %v268, 0.1
      %v333 = vmul.f32 %v269, 0.1
      %v334 = vmul.f32 %v270, 0.1
      %v335 = vmul.f32 %v271, 0.1
      %v336 = vmul.f32 %v272, 0.1
      %v337 = vmul.f32 %v273, 0.1
      %v338 = vmul.f32 %v274, 0.1
      %v339 = vmul.f32 %v275, 0.1
      %v340 = vmul.f32 %v276, 0.1
      %v341 = vmul.f32 %v277, 0.1
      %v342 = vmul.f32 %v278, 0.1
      %v343 = vmul.f32 %v279, 0.1
      %v344 = vmul.f32 %v280, 0.1
      %v345 = vmul.f32 %v281, 0.1
      %v346 = vmul.f32 %v282, 0.1
      %v347 = vmul.f32 %v283, 0.1
      %v348 = vsel %vm284, %v252, %v316
      %v349 = vsel %vm285, %v253, %v317
      %v350 = vsel %vm286, %v254, %v318
      %v351 = vsel %vm287, %v255, %v319
      %v352 = vsel %vm288, %v256, %v320
      %v353 = vsel %vm289, %v257, %v321
      %v354 = vsel %vm290, %v258, %v322
      %v355 = vsel %vm291, %v259, %v323
      %v356 = vsel %vm292, %v260, %v324
      %v357 = vsel %vm293, %v261, %v325
      %v358 = vsel %vm294, %v262, %v326
      %v359 = vsel %vm295, %v263, %v327
      %v360 = vsel %vm296, %v264, %v328
      %v361 = vsel %vm297, %v265, %v329
      %v362 = vsel %vm298, %v266, %v330
      %v363 = vsel %vm299, %v267, %v331
      %v364 = vsel %vm300, %v268, %v332
      %v365 = vsel %vm301, %v269, %v333
      %v366 = vsel %vm302, %v270, %v334
      %v367 = vsel %vm303, %v271, %v335
      %v368 = vsel %vm304, %v272, %v336
      %v369 = vsel %vm305, %v273, %v337
      %v370 = vsel %vm306, %v274, %v338
      %v371 = vsel %vm307, %v275, %v339
      %v372 = vsel %vm308, %v276, %v340
      %v373 = vsel %vm309, %v277, %v341
      %v374 = vsel %vm310, %v278, %v342
      %v375 = vsel %vm311, %v279, %v343
      %v376 = vsel %vm312, %v280, %v344
      %v377 = vsel %vm313, %v281, %v345
      %v378 = vsel %vm314, %v282, %v346
      %v379 = vsel %vm315, %v283, %v347
      %380 = vst [vmem:[%s172] sm:$0xff] %v348
      %381 = vst [vmem:[%s172 + $0x8] sm:$0xff] %v349
      %382 = vst [vmem:[%s172 + $0x10] sm:$0xff] %v350
      %383 = vst [vmem:[%s172 + $0x18] sm:$0xff] %v351
      %384 = vst [vmem:[%s172 + $0x20] sm:$0xff] %v352
      %385 = vst [vmem:[%s172 + $0x28] sm:$0xff] %v353
      %386 = vst [vmem:[%s172 + $0x30] sm:$0xff] %v354
      %387 = vst [vmem:[%s172 + $0x38] sm:$0xff] %v355
      %388 = vst [vmem:[%s172 + $0x40] sm:$0xff] %v356
      %389 = vst [vmem:[%s172 + $0x48] sm:$0xff] %v357
      %390 = vst [vmem:[%s172 + $0x50] sm:$0xff] %v358
      %391 = vst [vmem:[%s172 + $0x58] sm:$0xff] %v359
      %392 = vst [vmem:[%s172 + $0x60] sm:$0xff] %v360
      %393 = vst [vmem:[%s172 + $0x68] sm:$0xff] %v361
      %394 = vst [vmem:[%s172 + $0x70] sm:$0xff] %v362
      %395 = vst [vmem:[%s172 + $0x78] sm:$0xff] %v363
      %396 = vst [vmem:[%s172 + $0x80] sm:$0xff] %v364
      %397 = vst [vmem:[%s172 + $0x88] sm:$0xff] %v365
      %398 = vst [vmem:[%s172 + $0x90] sm:$0xff] %v366
      %399 = vst [vmem:[%s172 + $0x98] sm:$0xff] %v367
      %400 = vst [vmem:[%s172 + $0xa0] sm:$0xff] %v368
      %401 = vst [vmem:[%s172 + $0xa8] sm:$0xff] %v369
      %402 = vst [vmem:[%s172 + $0xb0] sm:$0xff] %v370
      %403 = vst [vmem:[%s172 + $0xb8] sm:$0xff] %v371
      %404 = vst [vmem:[%s172 + $0xc0] sm:$0xff] %v372
      %405 = vst [vmem:[%s172 + $0xc8] sm:$0xff] %v373
      %406 = vst [vmem:[%s172 + $0xd0] sm:$0xff] %v374
      %407 = vst [vmem:[%s172 + $0xd8] sm:$0xff] %v375
      %408 = vst [vmem:[%s172 + $0xe0] sm:$0xff] %v376
      %409 = vst [vmem:[%s172 + $0xe8] sm:$0xff] %v377
      %410 = vst [vmem:[%s172 + $0xf0] sm:$0xff] %v378
      %411 = vst [vmem:[%s172 + $0xf8] sm:$0xff] %v379
      %s412 = smul.u32 32, %s14
      %p413 = scmp.lt.s32.totalorder %s412, 63
      %s414 = scalar_select %p413, %s412, 63
      %s415 = smul.addr %s414, 8
      %s416 = scalar_lea.vmem %s3, %s415
      // Predicated region
      $region33: #{conv_block_forward.3} parent=31 // pred_check
        %p417 = pneg %p100
      $region34: #{conv_block_forward.3} parent=31 // pred_check_branch
        %419 = sbr.rel (%p417) target = $region36
      $region35: #{conv_block_forward.3} parent=31 // pred_region
        %s420 = smul.u32 32, %s14
      $region36: #{conv_block_forward.3} parent=31 // pred_fallthru
        _
    $region32: #{conv_block_forward.3} parent=5 // pred_fallthru
      _
    %p421 = scmp.le.s32.totalorder 2, %s9
    // Predicated region
    $region37: #{conv_block_forward.3} parent=5 // pred_check
      %p422 = pneg %p421
    $region38: #{conv_block_forward.3} parent=5 // pred_check_branch
      %424 = sbr.rel (%p422) target = $region40
    $region39: #{conv_block_forward.3} parent=5 // pred_region
      %s425 = ssub.s32 %s9, 2
      // Predicated region
      $region41: #{conv_block_forward.3} parent=39 // pred_check
        %p426 = pneg %p106
      $region42: #{conv_block_forward.3} parent=39 // pred_check_branch
        %428 = sbr.rel (%p426) target = $region44
      $region43: #{conv_block_forward.3} parent=39 // pred_region
        %s429 = smul.u32 32, %s15
        %p430 = scmp.lt.s32.totalorder %s429, 63
        %s431 = scalar_select %p430, %s429, 63
        %s432 = smul.addr %s431, 8
        %s433 = scalar_lea.vmem %s3, %s432
      $region44: #{conv_block_forward.3} parent=39 // pred_fallthru
        _
    $region40: #{conv_block_forward.3} parent=5 // pred_fallthru
      _
  $region6: #{conv_block_forward.3} parent=0 // loop_footer
    %s13 = sadd.s32 1, %s9
  $region7: #{conv_block_forward.3} parent=0 // loop_footer_branch
    %8 = sbr.rel target = $region3
  $region8: #{conv_block_forward.3} parent=0 // loop_exit
    _

// kernel: conv_block_forward.2
$region0: #{conv_block_forward.2}
  #allocation0 [shape = 'u32[]', space=smem, size = 0x4, offset = 0x4, fixed_abs, tag = 'smem constant byte address 0x4 - core index']
  #allocation1 [shape = 'u32[144,128]{1,0:T(1,128)}', space=vmem, size = 0x12000, scoped, tag = 'internal scratch']
  %s0 = inlined_call_operand.vmem [shape: bf16[512,36], index: 0, kind: input, shape index: {}]
  %s1 = inlined_call_operand.vmem [shape: bf16[36,128], index: 1, kind: input, shape index: {}]
  %s2 = inlined_call_operand.vmem [shape: f32[512,128], index: 2, kind: output, shape index: {0}]
  %s3 = inlined_call_operand.vmem [shape: f32[2,8,128], index: 3, kind: output, shape index: {1}]
  %s4 = inlined_call_operand.vmem [shape: f32[2,8,128], index: 4, kind: output, shape index: {2}]
  %5 = xla_tuple %s2, %s3, %s4
  %s6 = sld [smem:[#allocation0]]
  $region57: #{conv_block_forward.2} parent=0
    _
  %s8 = ssub.s32 1, %s6
  %s9 = scalar_select 0, %s8, %s6
  loop: start=0, step=1, limit=4
  $region2: #{conv_block_forward.2} parent=0 // loop_pre_header
    _
  $region3: #{conv_block_forward.2} parent=0 // loop_header
    %s11 = sphi 0, %s15
    %p12 = scmp.ge.s32.totalorder %s11, 4
    %s21 = sphi 0, %s23
    %s24 = sphi 0, %s21
    %s25 = sphi 0, %s24
    %s41 = sphi 0, %s25
    %s45 = sphi 0, %s45
    %s47 = sphi 0, %s45
    %s48 = sphi 0, %s47
    %s62 = sphi 0, %s48
    %s68 = sphi 0, %s70
    %s71 = sphi 0, %s68
    %s72 = sphi 0, %s71
    %s88 = sphi 0, %s72
    %s94 = sphi 0, %s96
    %s97 = sphi 0, %s94
    %s98 = sphi 0, %s97
    %s114 = sphi 0, %s98
    %s120 = sphi 0, %s122
    %s123 = sphi 0, %s120
    %s124 = sphi 0, %s123
    %s140 = sphi 0, %s124
  $region4: #{conv_block_forward.2} parent=0 // loop_header_branch
    %14 = sbr.rel (%p12) target = $region8
  $region5: #{conv_block_forward.2} parent=0 // loop_body
    %s16 = ssub.s32 %s11, 1
    %s17 = ssub.s32 %s11, 2
    %s18 = sadd.s32 %s11, 1
    %s19 = ssub.s32 %s11, %s18
    %p20 = scmp.eq.s32.totalorder %s19, 0
    %s22 = sadd.s32 %s21, 1
    %s23 = scalar_select %p20, %s21, %s22
    %p26 = pneg %p20
    %p27 = scmp.eq.s32.totalorder %s11, 1
    %p28 = por %p26, %p27
    %p29 = scmp.ne.s32.totalorder %s21, %s24
    %p30 = scmp.eq.s32.totalorder %s11, 0
    %p31 = por %p29, %p30
    %p32 = scmp.ne.s32.totalorder %s21, %s24
    %p33 = scmp.eq.s32.totalorder %s16, 1
    %p34 = por %p32, %p33
    %p35 = scmp.ne.s32.totalorder %s24, %s25
    %p36 = scmp.eq.s32.totalorder %s16, 0
    %p37 = por %p35, %p36
    %p38 = scmp.ne.s32.totalorder %s24, %s25
    %p39 = scmp.eq.s32.totalorder %s17, 1
    %p40 = por %p38, %p39
    %p42 = scmp.ne.s32.totalorder %s25, %s41
    %p43 = scmp.eq.s32.totalorder %s17, 0
    %p44 = por %p42, %p43
    %s46 = sadd.s32 %s45, 1
    %p49 = scmp.eq.s32.totalorder %s11, 1
    %p50 = scmp.ne.s32.totalorder %s45, %s47
    %p51 = scmp.eq.s32.totalorder %s11, 0
    %p52 = por %p50, %p51
    %p53 = scmp.ne.s32.totalorder %s45, %s47
    %p54 = scmp.eq.s32.totalorder %s16, 1
    %p55 = por %p53, %p54
    %p56 = scmp.ne.s32.totalorder %s47, %s48
    %p57 = scmp.eq.s32.totalorder %s16, 0
    %p58 = por %p56, %p57
    %p59 = scmp.ne.s32.totalorder %s47, %s48
    %p60 = scmp.eq.s32.totalorder %s17, 1
    %p61 = por %p59, %p60
    %p63 = scmp.ne.s32.totalorder %s48, %s62
    %p64 = scmp.eq.s32.totalorder %s17, 0
    %p65 = por %p63, %p64
    %s66 = ssub.s32 %s11, %s18
    %p67 = scmp.eq.s32.totalorder %s66, 0
    %s69 = sadd.s32 %s68, 1
    %s70 = scalar_select %p67, %s68, %s69
    %p73 = pneg %p67
    %p74 = scmp.eq.s32.totalorder %s11, 1
    %p75 = por %p73, %p74
    %p76 = scmp.ne.s32.totalorder %s68, %s71
    %p77 = scmp.eq.s32.totalorder %s11, 0
    %p78 = por %p76, %p77
    %p79 = scmp.ne.s32.totalorder %s68, %s71
    %p80 = scmp.eq.s32.totalorder %s16, 1
    %p81 = por %p79, %p80
    %p82 = scmp.ne.s32.totalorder %s71, %s72
    %p83 = scmp.eq.s32.totalorder %s16, 0
    %p84 = por %p82, %p83
    %p85 = scmp.ne.s32.totalorder %s71, %s72
    %p86 = scmp.eq.s32.totalorder %s17, 1
    %p87 = por %p85, %p86
    %p89 = scmp.ne.s32.totalorder %s72, %s88
    %p90 = scmp.eq.s32.totalorder %s17, 0
    %p91 = por %p89, %p90
    %s92 = ssub.s32 %s11, %s18
    %p93 = scmp.eq.s32.totalorder %s92, 0
    %s95 = sadd.s32 %s94, 1
    %s96 = scalar_select %p93, %s94, %s95
    %p99 = pneg %p93
    %p100 = scmp.eq.s32.totalorder %s11, 1
    %p101 = por %p99, %p100
    %p102 = scmp.ne.s32.totalorder %s94, %s97
    %p103 = scmp.eq.s32.totalorder %s11, 0
    %p104 = por %p102, %p103
    %p105 = scmp.ne.s32.totalorder %s94, %s97
    %p106 = scmp.eq.s32.totalorder %s16, 1
    %p107 = por %p105, %p106
    %p108 = scmp.ne.s32.totalorder %s97, %s98
    %p109 = scmp.eq.s32.totalorder %s16, 0
    %p110 = por %p108, %p109
    %p111 = scmp.ne.s32.totalorder %s97, %s98
    %p112 = scmp.eq.s32.totalorder %s17, 1
    %p113 = por %p111, %p112
    %p115 = scmp.ne.s32.totalorder %s98, %s114
    %p116 = scmp.eq.s32.totalorder %s17, 0
    %p117 = por %p115, %p116
    %s118 = ssub.s32 %s11, %s18
    %p119 = scmp.eq.s32.totalorder %s118, 0
    %s121 = sadd.s32 %s120, 1
    %s122 = scalar_select %p119, %s120, %s121
    %p125 = pneg %p119
    %p126 = scmp.eq.s32.totalorder %s11, 1
    %p127 = por %p125, %p126
    %p128 = scmp.ne.s32.totalorder %s120, %s123
    %p129 = scmp.eq.s32.totalorder %s11, 0
    %p130 = por %p128, %p129
    %p131 = scmp.ne.s32.totalorder %s120, %s123
    %p132 = scmp.eq.s32.totalorder %s16, 1
    %p133 = por %p131, %p132
    %p134 = scmp.ne.s32.totalorder %s123, %s124
    %p135 = scmp.eq.s32.totalorder %s16, 0
    %p136 = por %p134, %p135
    %p137 = scmp.ne.s32.totalorder %s123, %s124
    %p138 = scmp.eq.s32.totalorder %s17, 1
    %p139 = por %p137, %p138
    %p141 = scmp.ne.s32.totalorder %s124, %s140
    %p142 = scmp.eq.s32.totalorder %s17, 0
    %p143 = por %p141, %p142
    %p144 = scmp.le.s32.totalorder 1, %s11
    %p145 = scmp.lt.s32.totalorder %s11, 3
    %p146 = pnand %p144, %p145
    %p147 = pneg %p146
    // Predicated region
    $region9: #{conv_block_forward.2} parent=5 // pred_check
      _
    $region10: #{conv_block_forward.2} parent=5 // pred_check_branch
      %149 = sbr.rel (%p146) target = $region12
    $region11: #{conv_block_forward.2} parent=5 // pred_region
      %s150 = ssub.s32 %s11, 1
      // Predicated region
      $region13: #{conv_block_forward.2} parent=11 // pred_check
        %p151 = pneg %p58
      $region14: #{conv_block_forward.2} parent=11 // pred_check_branch
        %153 = sbr.rel (%p151) target = $region16
      $region15: #{conv_block_forward.2} parent=11 // pred_region
        _
      $region16: #{conv_block_forward.2} parent=11 // pred_fallthru
        _
    $region12: #{conv_block_forward.2} parent=5 // pred_fallthru
      _
    %p154 = scmp.lt.s32.totalorder %s11, 2
    // Predicated region
    $region17: #{conv_block_forward.2} parent=5 // pred_check
      %p155 = pneg %p154
    $region18: #{conv_block_forward.2} parent=5 // pred_check_branch
      %157 = sbr.rel (%p155) target = $region20
    $region19: #{conv_block_forward.2} parent=5 // pred_region
      // Predicated region
      $region21: #{conv_block_forward.2} parent=19 // pred_check
        %p158 = pneg %p31
      $region22: #{conv_block_forward.2} parent=19 // pred_check_branch
        %160 = sbr.rel (%p158) target = $region24
      $region23: #{conv_block_forward.2} parent=19 // pred_region
        %s161 = smul.u32 32, %s11
        %p162 = scmp.lt.s32.totalorder %s161, 63
        %s163 = scalar_select %p162, %s161, 63
        %s164 = smul.addr %s163, 4
        %s165 = scalar_lea.vmem %s0, %s164
        %s166 = smul.u32 32, %s11
      $region24: #{conv_block_forward.2} parent=19 // pred_fallthru
        _
    $region20: #{conv_block_forward.2} parent=5 // pred_fallthru
      _
    %p167 = scmp.le.s32.totalorder 1, %s11
    %p168 = scmp.lt.s32.totalorder %s11, 3
    %p169 = pnand %p167, %p168
    %p170 = pneg %p169
    // Predicated region
    $region25: #{conv_block_forward.2} parent=5 // pred_check
      _
    $region26: #{conv_block_forward.2} parent=5 // pred_check_branch
      %172 = sbr.rel (%p169) target = $region28
    $region27: #{conv_block_forward.2} parent=5 // pred_region
      %s173 = ssub.s32 %s11, 1
      %s174 = smul.u32 32, %s16
      %p175 = scmp.lt.s32.totalorder %s174, 63
      %s176 = scalar_select %p175, %s174, 63
      %s177 = smul.addr %s176, 4
      %s178 = scalar_lea.vmem %s0, %s177
      %p179 = pneg %p37
      %p180 = pneg %p34
      %p181 = pneg %p58
      %p182 = pneg %p55
      %p183 = pneg %p84
      %p184 = pneg %p81
      %s185 = smul.u32 32, %s16
      %p186 = scmp.lt.s32.totalorder %s185, 63
      %s187 = scalar_select %p186, %s185, 63
      %s188 = smul.addr %s187, 8
      %s189 = scalar_lea.vmem %s2, %s188
      %p190 = pneg %p110
      %p191 = pneg %p107
      %p192 = scmp.lt.s32.totalorder %s16, 1
      %s193 = scalar_select %p192, %s16, 1
      %s194 = smul.addr %s193, 8
      %s195 = scalar_lea.vmem %s3, %s194
      %p196 = pneg %p136
      %p197 = pneg %p133
      %p198 = scmp.lt.s32.totalorder %s16, 1
      %s199 = scalar_select %p198, %s16, 1
      %s200 = smul.addr %s199, 8
      %s201 = scalar_lea.vmem %s4, %s200
      %s202 = smul.u32 32, %s16
      %p203 = scmp.lt.s32.totalorder %s202, 63
      %s204 = scalar_select %p203, %s202, 63
      %s205 = smul.addr %s204, 4
      %s206 = scalar_lea.vmem %s0, %s205
      %s207 = smul.u32 32, %s16
      %s208 = smul.u32 32, %s16
      %p209 = scmp.lt.s32.totalorder %s208, 63
      %s210 = scalar_select %p209, %s208, 63
      %s211 = smul.addr %s210, 8
      %s212 = scalar_lea.vmem %s2, %s211
      %s213 = smul.u32 32, %s16
      %p214 = scmp.lt.s32.totalorder %s16, 1
      %s215 = scalar_select %p214, %s16, 1
      %s216 = smul.addr %s215, 8
      %s217 = scalar_lea.vmem %s3, %s216
      %p218 = scmp.lt.s32.totalorder %s16, 1
      %s219 = scalar_select %p218, %s16, 1
      %s220 = smul.addr %s219, 8
      %s221 = scalar_lea.vmem %s4, %s220
      %v223 = vld [vmem:[%s206] sm:$0xf]
      %v224 = vld [vmem:[%s206 + $0x4] sm:$0xf]
      %v225 = vld [vmem:[%s206 + $0x8] sm:$0xf]
      %v226 = vld [vmem:[%s206 + $0xc] sm:$0xf]
      %v227 = vld [vmem:[%s206 + $0x10] sm:$0xf]
      %v228 = vld [vmem:[%s206 + $0x14] sm:$0xf]
      %v229 = vld [vmem:[%s206 + $0x18] sm:$0xf]
      %v230 = vld [vmem:[%s206 + $0x1c] sm:$0xf]
      %v231 = vld [vmem:[%s206 + $0x20] sm:$0xf]
      %v232 = vld [vmem:[%s206 + $0x24] sm:$0xf]
      %v233 = vld [vmem:[%s206 + $0x28] sm:$0xf]
      %v234 = vld [vmem:[%s206 + $0x2c] sm:$0xf]
      %v235 = vld [vmem:[%s206 + $0x30] sm:$0xf]
      %v236 = vld [vmem:[%s206 + $0x34] sm:$0xf]
      %v237 = vld [vmem:[%s206 + $0x38] sm:$0xf]
      %v238 = vld [vmem:[%s206 + $0x3c] sm:$0xf]
      %v239 = vld [vmem:[%s206 + $0x40] sm:$0xf]
      %v240 = vld [vmem:[%s206 + $0x44] sm:$0xf]
      %v241 = vld [vmem:[%s206 + $0x48] sm:$0xf]
      %v242 = vld [vmem:[%s206 + $0x4c] sm:$0xf]
      %v243 = vld [vmem:[%s206 + $0x50] sm:$0xf]
      %v244 = vld [vmem:[%s206 + $0x54] sm:$0xf]
      %v245 = vld [vmem:[%s206 + $0x58] sm:$0xf]
      %v246 = vld [vmem:[%s206 + $0x5c] sm:$0xf]
      %v247 = vld [vmem:[%s206 + $0x60] sm:$0xf]
      %v248 = vld [vmem:[%s206 + $0x64] sm:$0xf]
      %v249 = vld [vmem:[%s206 + $0x68] sm:$0xf]
      %v250 = vld [vmem:[%s206 + $0x6c] sm:$0xf]
      %v251 = vld [vmem:[%s206 + $0x70] sm:$0xf]
      %v252 = vld [vmem:[%s206 + $0x74] sm:$0xf]
      %v253 = vld [vmem:[%s206 + $0x78] sm:$0xf]
      %v254 = vld [vmem:[%s206 + $0x7c] sm:$0xf]
      %v255 = vld [vmem:[%s1] sm:$0xf]
      %v256 = vld [vmem:[%s1 + $0x4] sm:$0xf]
      %v257 = vld [vmem:[%s1 + $0x8] sm:$0xf]
      %v258 = vld [vmem:[%s1 + $0xc] sm:$0xf]
      %v259 = vld [vmem:[%s1 + $0x10] sm:$0x3]
      %v292 = vunpack.c.l.b16 %v223
      %v293 = vunpack.c.l.b16 %v224
      %v294 = vunpack.c.l.b16 %v225
      %v295 = vunpack.c.l.b16 %v226
      %v296 = vunpack.c.l.b16 %v227
      %v297 = vunpack.c.l.b16 %v228
      %v298 = vunpack.c.l.b16 %v229
      %v299 = vunpack.c.l.b16 %v230
      %v300 = vunpack.c.l.b16 %v231
      %v301 = vunpack.c.l.b16 %v232
      %v302 = vunpack.c.l.b16 %v233
      %v303 = vunpack.c.l.b16 %v234
      %v304 = vunpack.c.l.b16 %v235
      %v305 = vunpack.c.l.b16 %v236
      %v306 = vunpack.c.l.b16 %v237
      %v307 = vunpack.c.l.b16 %v238
      %v308 = vunpack.c.l.b16 %v239
      %v309 = vunpack.c.l.b16 %v240
      %v310 = vunpack.c.l.b16 %v241
      %v311 = vunpack.c.l.b16 %v242
      %v312 = vunpack.c.l.b16 %v243
      %v313 = vunpack.c.l.b16 %v244
      %v314 = vunpack.c.l.b16 %v245
      %v315 = vunpack.c.l.b16 %v246
      %v316 = vunpack.c.l.b16 %v247
      %v317 = vunpack.c.l.b16 %v248
      %v318 = vunpack.c.l.b16 %v249
      %v319 = vunpack.c.l.b16 %v250
      %v320 = vunpack.c.l.b16 %v251
      %v321 = vunpack.c.l.b16 %v252
      %v322 = vunpack.c.l.b16 %v253
      %v323 = vunpack.c.l.b16 %v254
      %v324 = vpack.c.b16 %v293, %v292
      %v325 = vpack.c.b16 %v295, %v294
      %v326 = vpack.c.b16 %v297, %v296
      %v327 = vpack.c.b16 %v299, %v298
      %v328 = vpack.c.b16 %v301, %v300
      %v329 = vpack.c.b16 %v303, %v302
      %v330 = vpack.c.b16 %v305, %v304
      %v331 = vpack.c.b16 %v307, %v306
      %v332 = vpack.c.b16 %v309, %v308
      %v333 = vpack.c.b16 %v311, %v310
      %v334 = vpack.c.b16 %v313, %v312
      %v335 = vpack.c.b16 %v315, %v314
      %v336 = vpack.c.b16 %v317, %v316
      %v337 = vpack.c.b16 %v319, %v318
      %v338 = vpack.c.b16 %v321, %v320
      %v339 = vpack.c.b16 %v323, %v322
      %v345 = vunpack.c.l.b16 %v255
      %v346 = vunpack.c.l.b16 %v256
      %v347 = vunpack.c.l.b16 %v257
      %v348 = vunpack.c.l.b16 %v258
      %v349 = vunpack.c.l.b16 %v259
      %v350 = vpack.c.b16 %v346, %v345
      %v351 = vpack.c.b16 %v348, %v347
      %v352 = vpack.c.b16 %v349, %v349
      %vm355 = vcmask 293888
      %v357 = vsel %vm355, %v324, 0
      %v360 = vsel %vm355, %v325, 0
      %v363 = vsel %vm355, %v326, 0
      %v366 = vsel %vm355, %v327, 0
      %v369 = vsel %vm355, %v328, 0
      %v372 = vsel %vm355, %v329, 0
      %v375 = vsel %vm355, %v330, 0
      %v378 = vsel %vm355, %v331, 0
      %v381 = vsel %vm355, %v332, 0
      %v384 = vsel %vm355, %v333, 0
      %v387 = vsel %vm355, %v334, 0
      %v390 = vsel %vm355, %v335, 0
      %v393 = vsel %vm355, %v336, 0
      %v396 = vsel %vm355, %v337, 0
      %v399 = vsel %vm355, %v338, 0
      %v402 = vsel %vm355, %v339, 0
      %vm404 = vcmask 1041408
      %v406 = vsel %vm404, %v352, 0
      %408 = vmatprep.subr.bf16.mxu0 0
      %409 = vmatpush1.bf16.msra.mxu0 0
      %410 = vmatprep.subr.bf16.mxu0 0
      %411 = vmatpush1.bf16.msra.mxu0 0
      %412 = vmatprep.subr.bf16.mxu0 0
      %413 = vmatpush1.bf16.msra.mxu0 0
      %414 = vmatprep.subr.bf16.mxu0 0
      %415 = vmatpush1.bf16.msra.mxu0 0
      %416 = vmatprep.subr.bf16.mxu0 0
      %417 = vmatpush1.bf16.msra.mxu0 0
      %418 = vmatprep.subr.bf16.mxu0 0
      %419 = vmatpush1.bf16.msra.mxu0 %v406
      %420 = vmatprep.subr.bf16.mxu0 0
      %421 = vmatpush1.bf16.msra.mxu0 %v351
      %422 = vmatprep.subr.bf16.mxu0 0
      %423 = vmatpush1.bf16.msra.mxu0 %v350
      %424 = vmatprep.subr.bf16.mxu0 0
      %425 = vmatpush2.bf16.msra.mxu0 0
      %426 = vmatprep.subr.bf16.mxu0 0
      %427 = vmatpush2.bf16.msra.mxu0 0
      %428 = vmatprep.subr.bf16.mxu0 0
      %429 = vmatpush2.bf16.msra.mxu0 0
      %430 = vmatprep.subr.bf16.mxu0 0
      %431 = vmatpush2.bf16.msra.mxu0 0
      %432 = vmatprep.subr.bf16.mxu0 0
      %433 = vmatpush2.bf16.msra.mxu0 0
      %434 = vmatprep.subr.bf16.mxu0 0
      %435 = vmatpush2.bf16.msra.mxu0 0
      %436 = vmatprep.subr.bf16.mxu0 0
      %437 = vmatpush2.bf16.msra.mxu0 0
      %438 = vmatprep.subr.bf16.mxu0 0
      %439 = vmatpush2.bf16.msra.mxu0 0
      %440 = vmatprep.mubr.bf16.mxu0 0
      %441 = vmatmul.mubr.bf16.gmra.mxu0 %v357
      %v442 = vpop.f32.mrf.mxu0
      %v443 = vadd.f32 0.0, %v442
      %v444 = vpop.f32.mrf.mxu0
      %v445 = vpop.f32.mrf.mxu0
      %v446 = vadd.f32 0.0, %v445
      %v447 = vpop.f32.mrf.mxu0
      %448 = vmatprep.mubr.bf16.mxu0 0
      %449 = vmatmul.mubr.bf16.gmra.mxu0 %v360
      %v450 = vpop.f32.mrf.mxu0
      %v451 = vadd.f32 0.0, %v450
      %v452 = vpop.f32.mrf.mxu0
      %v453 = vpop.f32.mrf.mxu0
      %v454 = vadd.f32 0.0, %v453
      %v455 = vpop.f32.mrf.mxu0
      %456 = vmatprep.mubr.bf16.mxu0 0
      %457 = vmatmul.mubr.bf16.gmra.mxu0 %v363
      %v458 = vpop.f32.mrf.mxu0
      %v459 = vadd.f32 0.0, %v458
      %v460 = vpop.f32.mrf.mxu0
      %v461 = vpop.f32.mrf.mxu0
      %v462 = vadd.f32 0.0, %v461
      %v463 = vpop.f32.mrf.mxu0
      %464 = vmatprep.mubr.bf16.mxu0 0
      %465 = vmatmul.mubr.bf16.gmra.mxu0 %v366
      %v466 = vpop.f32.mrf.mxu0
      %v467 = vadd.f32 0.0, %v466
      %v468 = vpop.f32.mrf.mxu0
      %v469 = vpop.f32.mrf.mxu0
      %v470 = vadd.f32 0.0, %v469
      %v471 = vpop.f32.mrf.mxu0
      %472 = vmatprep.mubr.bf16.mxu0 0
      %473 = vmatmul.mubr.bf16.gmra.mxu0 %v369
      %v474 = vpop.f32.mrf.mxu0
      %v475 = vadd.f32 0.0, %v474
      %v476 = vpop.f32.mrf.mxu0
      %v477 = vpop.f32.mrf.mxu0
      %v478 = vadd.f32 0.0, %v477
      %v479 = vpop.f32.mrf.mxu0
      %480 = vmatprep.mubr.bf16.mxu0 0
      %481 = vmatmul.mubr.bf16.gmra.mxu0 %v372
      %v482 = vpop.f32.mrf.mxu0
      %v483 = vadd.f32 0.0, %v482
      %v484 = vpop.f32.mrf.mxu0
      %v485 = vpop.f32.mrf.mxu0
      %v486 = vadd.f32 0.0, %v485
      %v487 = vpop.f32.mrf.mxu0
      %488 = vmatprep.mubr.bf16.mxu0 0
      %489 = vmatmul.mubr.bf16.gmra.mxu0 %v375
      %v490 = vpop.f32.mrf.mxu0
      %v491 = vadd.f32 0.0, %v490
      %v492 = vpop.f32.mrf.mxu0
      %v493 = vpop.f32.mrf.mxu0
      %v494 = vadd.f32 0.0, %v493
      %v495 = vpop.f32.mrf.mxu0
      %496 = vmatprep.mubr.bf16.mxu0 0
      %497 = vmatmul.mubr.bf16.gmra.mxu0 %v378
      %v498 = vpop.f32.mrf.mxu0
      %v499 = vadd.f32 0.0, %v498
      %v500 = vpop.f32.mrf.mxu0
      %v501 = vpop.f32.mrf.mxu0
      %v502 = vadd.f32 0.0, %v501
      %v503 = vpop.f32.mrf.mxu0
      %504 = vmatprep.mubr.bf16.mxu0 0
      %505 = vmatmul.mubr.bf16.gmra.mxu0 %v381
      %v506 = vpop.f32.mrf.mxu0
      %v507 = vadd.f32 0.0, %v506
      %v508 = vpop.f32.mrf.mxu0
      %v509 = vpop.f32.mrf.mxu0
      %v510 = vadd.f32 0.0, %v509
      %v511 = vpop.f32.mrf.mxu0
      %512 = vmatprep.mubr.bf16.mxu0 0
      %513 = vmatmul.mubr.bf16.gmra.mxu0 %v384
      %v514 = vpop.f32.mrf.mxu0
      %v515 = vadd.f32 0.0, %v514
      %v516 = vpop.f32.mrf.mxu0
      %v517 = vpop.f32.mrf.mxu0
      %v518 = vadd.f32 0.0, %v517
      %v519 = vpop.f32.mrf.mxu0
      %520 = vmatprep.mubr.bf16.mxu0 0
      %521 = vmatmul.mubr.bf16.gmra.mxu0 %v387
      %v522 = vpop.f32.mrf.mxu0
      %v523 = vadd.f32 0.0, %v522
      %v524 = vpop.f32.mrf.mxu0
      %v525 = vpop.f32.mrf.mxu0
      %v526 = vadd.f32 0.0, %v525
      %v527 = vpop.f32.mrf.mxu0
      %528 = vmatprep.mubr.bf16.mxu0 0
      %529 = vmatmul.mubr.bf16.gmra.mxu0 %v390
      %v530 = vpop.f32.mrf.mxu0
      %v531 = vadd.f32 0.0, %v530
      %v532 = vpop.f32.mrf.mxu0
      %v533 = vpop.f32.mrf.mxu0
      %v534 = vadd.f32 0.0, %v533
      %v535 = vpop.f32.mrf.mxu0
      %536 = vmatprep.mubr.bf16.mxu0 0
      %537 = vmatmul.mubr.bf16.gmra.mxu0 %v393
      %v538 = vpop.f32.mrf.mxu0
      %v539 = vadd.f32 0.0, %v538
      %v540 = vpop.f32.mrf.mxu0
      %v541 = vpop.f32.mrf.mxu0
      %v542 = vadd.f32 0.0, %v541
      %v543 = vpop.f32.mrf.mxu0
      %544 = vmatprep.mubr.bf16.mxu0 0
      %545 = vmatmul.mubr.bf16.gmra.mxu0 %v396
      %v546 = vpop.f32.mrf.mxu0
      %v547 = vadd.f32 0.0, %v546
      %v548 = vpop.f32.mrf.mxu0
      %v549 = vpop.f32.mrf.mxu0
      %v550 = vadd.f32 0.0, %v549
      %v551 = vpop.f32.mrf.mxu0
      %552 = vmatprep.mubr.bf16.mxu0 0
      %553 = vmatmul.mubr.bf16.gmra.mxu0 %v399
      %v554 = vpop.f32.mrf.mxu0
      %v555 = vadd.f32 0.0, %v554
      %v556 = vpop.f32.mrf.mxu0
      %v557 = vpop.f32.mrf.mxu0
      %v558 = vadd.f32 0.0, %v557
      %v559 = vpop.f32.mrf.mxu0
      %560 = vmatprep.mubr.bf16.mxu0 0
      %561 = vmatmul.mubr.bf16.gmra.mxu0 %v402
      %v562 = vpop.f32.mrf.mxu0
      %v563 = vadd.f32 0.0, %v562
      %v564 = vpop.f32.mrf.mxu0
      %v565 = vpop.f32.mrf.mxu0
      %v566 = vadd.f32 0.0, %v565
      %v567 = vpop.f32.mrf.mxu0
      %568 = vdwg.mxu0
      %569 = vst [vmem:[%s212] sm:$0xff] %v443
      %570 = vst [vmem:[%s212 + $0x8] sm:$0xff] %v446
      %571 = vst [vmem:[%s212 + $0x10] sm:$0xff] %v451
      %572 = vst [vmem:[%s212 + $0x18] sm:$0xff] %v454
      %573 = vst [vmem:[%s212 + $0x20] sm:$0xff] %v459
      %574 = vst [vmem:[%s212 + $0x28] sm:$0xff] %v462
      %575 = vst [vmem:[%s212 + $0x30] sm:$0xff] %v467
      %576 = vst [vmem:[%s212 + $0x38] sm:$0xff] %v470
      %577 = vst [vmem:[%s212 + $0x40] sm:$0xff] %v475
      %578 = vst [vmem:[%s212 + $0x48] sm:$0xff] %v478
      %579 = vst [vmem:[%s212 + $0x50] sm:$0xff] %v483
      %580 = vst [vmem:[%s212 + $0x58] sm:$0xff] %v486
      %581 = vst [vmem:[%s212 + $0x60] sm:$0xff] %v491
      %582 = vst [vmem:[%s212 + $0x68] sm:$0xff] %v494
      %583 = vst [vmem:[%s212 + $0x70] sm:$0xff] %v499
      %584 = vst [vmem:[%s212 + $0x78] sm:$0xff] %v502
      %585 = vst [vmem:[%s212 + $0x80] sm:$0xff] %v507
      %586 = vst [vmem:[%s212 + $0x88] sm:$0xff] %v510
      %587 = vst [vmem:[%s212 + $0x90] sm:$0xff] %v515
      %588 = vst [vmem:[%s212 + $0x98] sm:$0xff] %v518
      %589 = vst [vmem:[%s212 + $0xa0] sm:$0xff] %v523
      %590 = vst [vmem:[%s212 + $0xa8] sm:$0xff] %v526
      %591 = vst [vmem:[%s212 + $0xb0] sm:$0xff] %v531
      %592 = vst [vmem:[%s212 + $0xb8] sm:$0xff] %v534
      %593 = vst [vmem:[%s212 + $0xc0] sm:$0xff] %v539
      %594 = vst [vmem:[%s212 + $0xc8] sm:$0xff] %v542
      %595 = vst [vmem:[%s212 + $0xd0] sm:$0xff] %v547
      %596 = vst [vmem:[%s212 + $0xd8] sm:$0xff] %v550
      %597 = vst [vmem:[%s212 + $0xe0] sm:$0xff] %v555
      %598 = vst [vmem:[%s212 + $0xe8] sm:$0xff] %v558
      %599 = vst [vmem:[%s212 + $0xf0] sm:$0xff] %v563
      %600 = vst [vmem:[%s212 + $0xf8] sm:$0xff] %v566
      %v601 = vadd.f32 %v443, %v446
      %v602 = vadd.f32 %v601, %v451
      %v603 = vadd.f32 %v602, %v454
      %v604 = vadd.f32 %v603, %v459
      %v605 = vadd.f32 %v604, %v462
      %v606 = vadd.f32 %v605, %v467
      %v607 = vadd.f32 %v606, %v470
      %v608 = vadd.f32 %v607, %v475
      %v609 = vadd.f32 %v608, %v478
      %v610 = vadd.f32 %v609, %v483
      %v611 = vadd.f32 %v610, %v486
      %v612 = vadd.f32 %v611, %v491
      %v613 = vadd.f32 %v612, %v494
      %v614 = vadd.f32 %v613, %v499
      %v615 = vadd.f32 %v614, %v502
      %v616 = vadd.f32 %v615, %v507
      %v617 = vadd.f32 %v616, %v510
      %v618 = vadd.f32 %v617, %v515
      %v619 = vadd.f32 %v618, %v518
      %v620 = vadd.f32 %v619, %v523
      %v621 = vadd.f32 %v620, %v526
      %v622 = vadd.f32 %v621, %v531
      %v623 = vadd.f32 %v622, %v534
      %v624 = vadd.f32 %v623, %v539
      %v625 = vadd.f32 %v624, %v542
      %v626 = vadd.f32 %v625, %v547
      %v627 = vadd.f32 %v626, %v550
      %v628 = vadd.f32 %v627, %v555
      %v629 = vadd.f32 %v628, %v558
      %v630 = vadd.f32 %v629, %v563
      %v631 = vadd.f32 %v630, %v566
      %v632 = vrot.slane %v631, 4
      %v633 = vadd.f32 %v631, %v632
      %v634 = vrot.slane %v633, 2
      %v635 = vadd.f32 %v633, %v634
      %v636 = vrot.slane %v635, 1
      %v637 = vadd.f32 %v635, %v636
      %v638 = vmul.f32 %v443, %v443
      %v639 = vmul.f32 %v446, %v446
      %v640 = vmul.f32 %v451, %v451
      %v641 = vmul.f32 %v454, %v454
      %v642 = vmul.f32 %v459, %v459
      %v643 = vmul.f32 %v462, %v462
      %v644 = vmul.f32 %v467, %v467
      %v645 = vmul.f32 %v470, %v470
      %v646 = vmul.f32 %v475, %v475
      %v647 = vmul.f32 %v478, %v478
      %v648 = vmul.f32 %v483, %v483
      %v649 = vmul.f32 %v486, %v486
      %v650 = vmul.f32 %v491, %v491
      %v651 = vmul.f32 %v494, %v494
      %v652 = vmul.f32 %v499, %v499
      %v653 = vmul.f32 %v502, %v502
      %v654 = vmul.f32 %v507, %v507
      %v655 = vmul.f32 %v510, %v510
      %v656 = vmul.f32 %v515, %v515
      %v657 = vmul.f32 %v518, %v518
      %v658 = vmul.f32 %v523, %v523
      %v659 = vmul.f32 %v526, %v526
      %v660 = vmul.f32 %v531, %v531
      %v661 = vmul.f32 %v534, %v534
      %v662 = vmul.f32 %v539, %v539
      %v663 = vmul.f32 %v542, %v542
      %v664 = vmul.f32 %v547, %v547
      %v665 = vmul.f32 %v550, %v550
      %v666 = vmul.f32 %v555, %v555
      %v667 = vmul.f32 %v558, %v558
      %v668 = vmul.f32 %v563, %v563
      %v669 = vmul.f32 %v566, %v566
      %v670 = vadd.f32 %v638, %v639
      %v671 = vadd.f32 %v670, %v640
      %v672 = vadd.f32 %v671, %v641
      %v673 = vadd.f32 %v672, %v642
      %v674 = vadd.f32 %v673, %v643
      %v675 = vadd.f32 %v674, %v644
      %v676 = vadd.f32 %v675, %v645
      %v677 = vadd.f32 %v676, %v646
      %v678 = vadd.f32 %v677, %v647
      %v679 = vadd.f32 %v678, %v648
      %v680 = vadd.f32 %v679, %v649
      %v681 = vadd.f32 %v680, %v650
      %v682 = vadd.f32 %v681, %v651
      %v683 = vadd.f32 %v682, %v652
      %v684 = vadd.f32 %v683, %v653
      %v685 = vadd.f32 %v684, %v654
      %v686 = vadd.f32 %v685, %v655
      %v687 = vadd.f32 %v686, %v656
      %v688 = vadd.f32 %v687, %v657
      %v689 = vadd.f32 %v688, %v658
      %v690 = vadd.f32 %v689, %v659
      %v691 = vadd.f32 %v690, %v660
      %v692 = vadd.f32 %v691, %v661
      %v693 = vadd.f32 %v692, %v662
      %v694 = vadd.f32 %v693, %v663
      %v695 = vadd.f32 %v694, %v664
      %v696 = vadd.f32 %v695, %v665
      %v697 = vadd.f32 %v696, %v666
      %v698 = vadd.f32 %v697, %v667
      %v699 = vadd.f32 %v698, %v668
      %v700 = vadd.f32 %v699, %v669
      %v701 = vrot.slane %v700, 4
      %v702 = vadd.f32 %v700, %v701
      %v703 = vrot.slane %v702, 2
      %v704 = vadd.f32 %v702, %v703
      %v705 = vrot.slane %v704, 1
      %v706 = vadd.f32 %v704, %v705
      %707 = vst [vmem:[%s217] sm:$0xff] %v637
      %708 = vst [vmem:[%s221] sm:$0xff] %v706
      %s709 = smul.u32 32, %s16
      %p710 = scmp.lt.s32.totalorder %s709, 63
      %s711 = scalar_select %p710, %s709, 63
      %s712 = smul.addr %s711, 8
      %s713 = scalar_lea.vmem %s2, %s712
      %p714 = scmp.lt.s32.totalorder %s16, 1
      %s715 = scalar_select %p714, %s16, 1
      %s716 = smul.addr %s715, 8
      %s717 = scalar_lea.vmem %s3, %s716
      %p718 = scmp.lt.s32.totalorder %s16, 1
      %s719 = scalar_select %p718, %s16, 1
      %s720 = smul.addr %s719, 8
      %s721 = scalar_lea.vmem %s4, %s720
      // Predicated region
      $region29: #{conv_block_forward.2} parent=27 // pred_check
        %p722 = pneg %p81
      $region30: #{conv_block_forward.2} parent=27 // pred_check_branch
        %724 = sbr.rel (%p722) target = $region32
      $region31: #{conv_block_forward.2} parent=27 // pred_region
        %s725 = smul.u32 32, %s16
      $region32: #{conv_block_forward.2} parent=27 // pred_fallthru
        _
      // Predicated region
      $region33: #{conv_block_forward.2} parent=27 // pred_check
        %p726 = pneg %p107
      $region34: #{conv_block_forward.2} parent=27 // pred_check_branch
        %728 = sbr.rel (%p726) target = $region36
      $region35: #{conv_block_forward.2} parent=27 // pred_region
        _
      $region36: #{conv_block_forward.2} parent=27 // pred_fallthru
        _
      // Predicated region
      $region37: #{conv_block_forward.2} parent=27 // pred_check
        %p729 = pneg %p133
      $region38: #{conv_block_forward.2} parent=27 // pred_check_branch
        %731 = sbr.rel (%p729) target = $region40
      $region39: #{conv_block_forward.2} parent=27 // pred_region
        _
      $region40: #{conv_block_forward.2} parent=27 // pred_fallthru
        _
    $region28: #{conv_block_forward.2} parent=5 // pred_fallthru
      _
    %p732 = scmp.le.s32.totalorder 2, %s11
    // Predicated region
    $region41: #{conv_block_forward.2} parent=5 // pred_check
      %p733 = pneg %p732
    $region42: #{conv_block_forward.2} parent=5 // pred_check_branch
      %735 = sbr.rel (%p733) target = $region44
    $region43: #{conv_block_forward.2} parent=5 // pred_region
      %s736 = ssub.s32 %s11, 2
      // Predicated region
      $region45: #{conv_block_forward.2} parent=43 // pred_check
        %p737 = pneg %p87
      $region46: #{conv_block_forward.2} parent=43 // pred_check_branch
        %739 = sbr.rel (%p737) target = $region48
      $region47: #{conv_block_forward.2} parent=43 // pred_region
        %s740 = smul.u32 32, %s17
        %p741 = scmp.lt.s32.totalorder %s740, 63
        %s742 = scalar_select %p741, %s740, 63
        %s743 = smul.addr %s742, 8
        %s744 = scalar_lea.vmem %s2, %s743
      $region48: #{conv_block_forward.2} parent=43 // pred_fallthru
        _
      // Predicated region
      $region49: #{conv_block_forward.2} parent=43 // pred_check
        %p745 = pneg %p113
      $region50: #{conv_block_forward.2} parent=43 // pred_check_branch
        %747 = sbr.rel (%p745) target = $region52
      $region51: #{conv_block_forward.2} parent=43 // pred_region
        %p748 = scmp.lt.s32.totalorder %s17, 1
        %s749 = scalar_select %p748, %s17, 1
        %s750 = smul.addr %s749, 8
        %s751 = scalar_lea.vmem %s3, %s750
      $region52: #{conv_block_forward.2} parent=43 // pred_fallthru
        _
      // Predicated region
      $region53: #{conv_block_forward.2} parent=43 // pred_check
        %p752 = pneg %p139
      $region54: #{conv_block_forward.2} parent=43 // pred_check_branch
        %754 = sbr.rel (%p752) target = $region56
      $region55: #{conv_block_forward.2} parent=43 // pred_region
        %p755 = scmp.lt.s32.totalorder %s17, 1
        %s756 = scalar_select %p755, %s17, 1
        %s757 = smul.addr %s756, 8
        %s758 = scalar_lea.vmem %s4, %s757
      $region56: #{conv_block_forward.2} parent=43 // pred_fallthru
        _
    $region44: #{conv_block_forward.2} parent=5 // pred_fallthru
      _
  $region6: #{conv_block_forward.2} parent=0 // loop_footer
    %s15 = sadd.s32 1, %s11
  $region7: #{conv_block_forward.2} parent=0 // loop_footer_branch
    %10 = sbr.rel target = $region3
  $region8: #{conv_block_forward.2} parent=0 // loop_exit
    _

</llo_original>
